<compile_context>
chip_gen: v7x
topology: tpu7x:2x2x1
jax: 0.10.0
libtpu: 0.0.40
codegen_flags: <defaults>
</compile_context>

<pallas_src>
import functools

import jax
import jax.numpy as jnp
from jax.experimental import pallas as pl
from jax.experimental.pallas import tpu as pltpu


def _series_decomp_kernel(x_ref, res_ref, mean_ref, xpad_ref, *, kernel_size):
    """x_ref: (TB, L, TC) tile. Writes res/mean (TB, L, TC).

    xpad_ref: (TB, L + 2*pad, TC) f32 scratch holding the edge-padded tile.
    """
    pad = (kernel_size - 1) // 2
    TB, L, TC = x_ref.shape

    # Single cast to f32; fused edge-replication pad into VMEM scratch.
    xt = x_ref[...].astype(jnp.float32)                      # (TB, L, TC)
    xpad_ref[:, pad:pad + L, :] = xt
    if pad > 0:
        edge_shape = (TB, pad, TC)
        xpad_ref[:, 0:pad, :] = jnp.broadcast_to(xt[:, 0:1, :], edge_shape)
        xpad_ref[:, pad + L:pad + L + pad, :] = jnp.broadcast_to(
            xt[:, L - 1:L, :], edge_shape)

    # Unrolled static sliding-window sum over the k taps; all reads are f32
    # slices of the scratch (no per-tap dtype converts).
    acc = jnp.zeros(xt.shape, dtype=jnp.float32)
    for j in range(kernel_size):
        acc = acc + xpad_ref[:, j:j + L, :]
    mean = acc * (1.0 / kernel_size)

    mean_ref[...] = mean.astype(mean_ref.dtype)
    res_ref[...] = (xt - mean).astype(res_ref.dtype)


def _choose_tiles(B3, L, C3):
    """Pick (TB, TC): lane tile full or a multiple of 128; ~1 MiB input/block."""
    if C3 <= 512:
        TC = C3                      # full extent (no (8,128) constraint issue)
    else:
        TC = 512                     # multiple of 128
    budget = 1 << 20                 # ~1 MiB of input per block
    per_b = max(L * TC * 4, 1)
    TB = max(1, min(B3, budget // per_b))
    return TB, TC


def _decomp_3d(x3, kernel_size):
    """x3: (B3, L, C3). Returns (res, mean) with the same shape/dtype."""
    B3, L, C3 = x3.shape
    pad = (kernel_size - 1) // 2
    Lp = L + 2 * pad

    TB, TC = _choose_tiles(B3, L, C3)
    grid = (pl.cdiv(B3, TB), pl.cdiv(C3, TC))

    kernel = functools.partial(_series_decomp_kernel, kernel_size=kernel_size)

    out_shapes = (
        jax.ShapeDtypeStruct((B3, L, C3), x3.dtype),  # res
        jax.ShapeDtypeStruct((B3, L, C3), x3.dtype),  # moving_mean
    )
    block = pl.BlockSpec((TB, L, TC), lambda b, c: (b, 0, c))

    return pl.pallas_call(
        kernel,
        out_shape=out_shapes,
        grid_spec=pltpu.PrefetchScalarGridSpec(
            num_scalar_prefetch=0,
            grid=grid,
            in_specs=[block],
            out_specs=(
                pl.BlockSpec((TB, L, TC), lambda b, c: (b, 0, c)),
                pl.BlockSpec((TB, L, TC), lambda b, c: (b, 0, c)),
            ),
            scratch_shapes=[pltpu.VMEM((TB, Lp, TC), jnp.float32)],
        ),
        compiler_params=pltpu.CompilerParams(
            dimension_semantics=("parallel", "parallel"),
        ),
    )(x3)


def series_decomp(x, kernel_size):
    """x: (B, L, C) array. Returns (res, moving_mean), both (B, L, C)."""
    if kernel_size < 1 or kernel_size % 2 != 1:
        # PyTorch series_decomp with even k would produce L-1 outputs and fail
        # the residual broadcast, so only odd kernel sizes are meaningful.
        raise ValueError("series_decomp requires an odd kernel_size >= 1")
    B, L, C = x.shape

    if C >= 128:
        # Channel axis is already lane-dense: run in native layout, no
        # wrapper transposes (saves two full HBM round-trips over the data).
        return _decomp_3d(x, kernel_size)

    # Small C: lane-pack B*C onto the 128-lane axis (time on sublanes) so
    # output stores are dense rather than masked tiny-lane vsts.
    N = B * C
    x3 = jnp.transpose(x, (1, 0, 2)).reshape(1, L, N)
    res3, mean3 = _decomp_3d(x3, kernel_size)
    res = jnp.transpose(res3.reshape(L, B, C), (1, 0, 2))
    mean = jnp.transpose(mean3.reshape(L, B, C), (1, 0, 2))
    return res, mean


def _reference(x, kernel_size):
    """Pure-JAX reference mirroring the PyTorch forward."""
    pad = (kernel_size - 1) // 2
    front = jnp.repeat(x[:, 0:1, :], pad, axis=1)
    end = jnp.repeat(x[:, -1:, :], pad, axis=1)
    xpad = jnp.concatenate([front, x, end], axis=1)
    L_out = xpad.shape[1] - kernel_size + 1
    windows = jnp.stack(
        [xpad[:, j:j + L_out, :] for j in range(kernel_size)], axis=0
    )
    mean = jnp.mean(windows, axis=0)
    return x - mean, mean


if __name__ == "__main__":
    key = jax.random.PRNGKey(0)

    # Case 1: small decomposition block (odd k=5), lane-packed path (C < 128).
    B, L, C, k = 2, 16, 8, 5
    x = jax.random.normal(key, (B, L, C), dtype=jnp.float32)
    res, mean = series_decomp(x, k)
    res, mean = jax.block_until_ready((res, mean))
    res_ref, mean_ref = _reference(x, k)
    assert jnp.allclose(res, res_ref, atol=1e-5, rtol=1e-5)
    assert jnp.allclose(mean, mean_ref, atol=1e-5, rtol=1e-5)

    # Case 2: Autoformer-style larger window (k=25), lane-packed path.
    B2, L2, C2, k2 = 3, 24, 6, 25
    x2 = jax.random.normal(jax.random.PRNGKey(1), (B2, L2, C2), dtype=jnp.float32)
    res2, mean2 = series_decomp(x2, k2)
    res2, mean2 = jax.block_until_ready((res2, mean2))
    res2_ref, mean2_ref = _reference(x2, k2)
    assert jnp.allclose(res2, res2_ref, atol=1e-5, rtol=1e-5)
    assert jnp.allclose(mean2, mean2_ref, atol=1e-5, rtol=1e-5)

    # Case 3: lane-dense channels (C >= 128) -> native-layout path, no transposes.
    B3, L3, C3, k3 = 2, 12, 160, 5
    x3 = jax.random.normal(jax.random.PRNGKey(2), (B3, L3, C3), dtype=jnp.float32)
    res3, mean3 = series_decomp(x3, k3)
    res3, mean3 = jax.block_until_ready((res3, mean3))
    res3_ref, mean3_ref = _reference(x3, k3)
    assert jnp.allclose(res3, res3_ref, atol=1e-5, rtol=1e-5)
    assert jnp.allclose(mean3, mean3_ref, atol=1e-5, rtol=1e-5)

    print("KERNEL_OK")
</pallas_src>

<mosaic_0001>
module attributes {stable_mosaic.version = 11 : i64} {
  func.func @_series_decomp_kernel(%arg0: i32, %arg1: i32, %arg2: memref<1x16x16xf32, #tpu.memory_space<vmem>>, %arg3: memref<1x16x16xf32, #tpu.memory_space<vmem>>, %arg4: memref<1x16x16xf32, #tpu.memory_space<vmem>>, %arg5: memref<1x20x16xf32, #tpu.memory_space<vmem>>) attributes {dimension_semantics = [#tpu.dimension_semantics<parallel>, #tpu.dimension_semantics<parallel>], iteration_bounds = array<i64: 1, 1>, scalar_prefetch = 0 : i64, scratch_operands = 1 : i64, tpu.core_type = #tpu.core_type<tc>, window_params = [{transform_indices = @transform_0, window_bounds = array<i64: 1, 16, 16>}, {transform_indices = @transform_1, window_bounds = array<i64: 1, 16, 16>}, {transform_indices = @transform_2, window_bounds = array<i64: 1, 16, 16>}]} {
    %c0 = arith.constant 0 : index
    %c0_0 = arith.constant 0 : index
    %c0_1 = arith.constant 0 : index
    %0 = vector.load %arg2[%c0, %c0_0, %c0_1] : memref<1x16x16xf32, #tpu.memory_space<vmem>>, vector<1x16x16xf32>
    %c0_2 = arith.constant 0 : index
    %c2 = arith.constant 2 : index
    %c0_3 = arith.constant 0 : index
    %1 = vector.load %arg5[%c0_2, %c2, %c0_3] : memref<1x20x16xf32, #tpu.memory_space<vmem>>, vector<1x16x16xf32>
    tpu.vector_store %arg5[%c0_2, %c2, %c0_3], %0 {strides = array<i32>} : memref<1x20x16xf32, #tpu.memory_space<vmem>>, vector<1x16x16xf32>,
    %2 = vector.extract_strided_slice %0 {offsets = [0, 0, 0], sizes = [1, 1, 16], strides = [1, 1, 1]} : vector<1x16x16xf32> to vector<1x1x16xf32>
    %3 = vector.shape_cast %2 : vector<1x1x16xf32> to vector<1x1x16xf32>
    %4 = vector.broadcast %3 : vector<1x1x16xf32> to vector<1x2x16xf32>
    %c0_4 = arith.constant 0 : index
    %c0_5 = arith.constant 0 : index
    %c0_6 = arith.constant 0 : index
    %5 = vector.load %arg5[%c0_4, %c0_5, %c0_6] : memref<1x20x16xf32, #tpu.memory_space<vmem>>, vector<1x2x16xf32>
    tpu.vector_store %arg5[%c0_4, %c0_5, %c0_6], %4 {strides = array<i32>} : memref<1x20x16xf32, #tpu.memory_space<vmem>>, vector<1x2x16xf32>,
    %6 = vector.extract_strided_slice %0 {offsets = [0, 15, 0], sizes = [1, 1, 16], strides = [1, 1, 1]} : vector<1x16x16xf32> to vector<1x1x16xf32>
    %7 = vector.shape_cast %6 : vector<1x1x16xf32> to vector<1x1x16xf32>
    %8 = vector.broadcast %7 : vector<1x1x16xf32> to vector<1x2x16xf32>
    %c0_7 = arith.constant 0 : index
    %c18 = arith.constant 18 : index
    %c0_8 = arith.constant 0 : index
    %9 = vector.load %arg5[%c0_7, %c18, %c0_8] : memref<1x20x16xf32, #tpu.memory_space<vmem>>, vector<1x2x16xf32>
    tpu.vector_store %arg5[%c0_7, %c18, %c0_8], %8 {strides = array<i32>} : memref<1x20x16xf32, #tpu.memory_space<vmem>>, vector<1x2x16xf32>,
    %cst = arith.constant 0.000000e+00 : f32
    %10 = vector.broadcast %cst : f32 to vector<1x16x16xf32>
    %c0_9 = arith.constant 0 : index
    %c0_10 = arith.constant 0 : index
    %c0_11 = arith.constant 0 : index
    %11 = vector.load %arg5[%c0_9, %c0_10, %c0_11] : memref<1x20x16xf32, #tpu.memory_space<vmem>>, vector<1x16x16xf32>
    %12 = arith.addf %10, %11 : vector<1x16x16xf32>
    %c0_12 = arith.constant 0 : index
    %c1 = arith.constant 1 : index
    %c0_13 = arith.constant 0 : index
    %13 = vector.load %arg5[%c0_12, %c1, %c0_13] : memref<1x20x16xf32, #tpu.memory_space<vmem>>, vector<1x16x16xf32>
    %14 = arith.addf %12, %13 : vector<1x16x16xf32>
    %c0_14 = arith.constant 0 : index
    %c2_15 = arith.constant 2 : index
    %c0_16 = arith.constant 0 : index
    %15 = vector.load %arg5[%c0_14, %c2_15, %c0_16] : memref<1x20x16xf32, #tpu.memory_space<vmem>>, vector<1x16x16xf32>
    %16 = arith.addf %14, %15 : vector<1x16x16xf32>
    %c0_17 = arith.constant 0 : index
    %c3 = arith.constant 3 : index
    %c0_18 = arith.constant 0 : index
    %17 = vector.load %arg5[%c0_17, %c3, %c0_18] : memref<1x20x16xf32, #tpu.memory_space<vmem>>, vector<1x16x16xf32>
    %18 = arith.addf %16, %17 : vector<1x16x16xf32>
    %c0_19 = arith.constant 0 : index
    %c4 = arith.constant 4 : index
    %c0_20 = arith.constant 0 : index
    %19 = vector.load %arg5[%c0_19, %c4, %c0_20] : memref<1x20x16xf32, #tpu.memory_space<vmem>>, vector<1x16x16xf32>
    %20 = arith.addf %18, %19 : vector<1x16x16xf32>
    %cst_21 = arith.constant 2.000000e-01 : f32
    %21 = vector.broadcast %cst_21 : f32 to vector<1x16x16xf32>
    %22 = arith.mulf %20, %21 : vector<1x16x16xf32>
    %c0_22 = arith.constant 0 : index
    %c0_23 = arith.constant 0 : index
    %c0_24 = arith.constant 0 : index
    %23 = vector.load %arg4[%c0_22, %c0_23, %c0_24] : memref<1x16x16xf32, #tpu.memory_space<vmem>>, vector<1x16x16xf32>
    tpu.vector_store %arg4[%c0_22, %c0_23, %c0_24], %22 {strides = array<i32>} : memref<1x16x16xf32, #tpu.memory_space<vmem>>, vector<1x16x16xf32>,
    %24 = arith.subf %0, %22 : vector<1x16x16xf32>
    %c0_25 = arith.constant 0 : index
    %c0_26 = arith.constant 0 : index
    %c0_27 = arith.constant 0 : index
    %25 = vector.load %arg3[%c0_25, %c0_26, %c0_27] : memref<1x16x16xf32, #tpu.memory_space<vmem>>, vector<1x16x16xf32>
    tpu.vector_store %arg3[%c0_25, %c0_26, %c0_27], %24 {strides = array<i32>} : memref<1x16x16xf32, #tpu.memory_space<vmem>>, vector<1x16x16xf32>,
    return
  }
  func.func @transform_0(%arg0: i32, %arg1: i32) -> (i32, i32, i32) {
    %c0_i32 = arith.constant 0 : i32
    %c0_i32_0 = arith.constant 0 : i32
    return %arg0, %c0_i32, %arg1 : i32, i32, i32
  }
  func.func @transform_1(%arg0: i32, %arg1: i32) -> (i32, i32, i32) {
    %c0_i32 = arith.constant 0 : i32
    %c0_i32_0 = arith.constant 0 : i32
    return %arg0, %c0_i32, %arg1 : i32, i32, i32
  }
  func.func @transform_2(%arg0: i32, %arg1: i32) -> (i32, i32, i32) {
    %c0_i32 = arith.constant 0 : i32
    %c0_i32_0 = arith.constant 0 : i32
    return %arg0, %c0_i32, %arg1 : i32, i32, i32
  }
}

</mosaic_0001>

<llo_original>
// kernel: tpu_custom_call.1
$region0: #{tpu_custom_call.1}
  #allocation0 [shape = 'u32[]', space=smem, size = 0x4, offset = 0x4, fixed_abs, tag = 'smem constant byte address 0x4 - core index']
  #allocation1 [shape = 'u32[144,128]{1,0:T(1,128)}', space=vmem, size = 0x12000, scoped, tag = 'internal scratch']
  #allocation2 [shape = 'f32[1,20,16]{2,1,0:T(8,128)}', space=vmem, size = 0x3000, scoped, tag = 'scratch operand']
  %s0 = inlined_call_operand.hbm [shape: f32[1,16,16], index: 0, kind: input, shape index: {}]
  %s1 = inlined_call_operand.hbm [shape: f32[1,16,16], index: 1, kind: output, shape index: {0}]
  %s2 = inlined_call_operand.hbm [shape: f32[1,16,16], index: 2, kind: output, shape index: {1}]
  %3 = xla_tuple %s1, %s2
  %s4 = sld [smem:[#allocation0]]
  $region26: #{tpu_custom_call.1} parent=0
    _
  %s6 = ssub.s32 1, %s4
  %s7 = scalar_select 0, %s6, %s4
  $region1: #{tpu_custom_call.1} parent=0
    #allocation3 [shape = 'u8[8192]{0}', space=vmem, size = 0x2000, scoped, tag = 'input window, operand 0, single buffered']
    #allocation4 [shape = 's32[1]{0}', space=sflag, size = 0x4, scoped, tag = 'scoped memory for tpu_custom_call.1']
    #allocation5 [shape = 's32[1]{0}', space=sflag, size = 0x4, scoped, tag = 'scoped memory for tpu_custom_call.1']
    #allocation6 [shape = 'u8[8192]{0}', space=vmem, size = 0x2000, scoped, tag = 'output window, operand 0, single buffered']
    #allocation7 [shape = 'u8[8192]{0}', space=vmem, size = 0x2000, scoped, tag = 'output window, operand 1, single buffered']
    #allocation8 [shape = 's32[1]{0}', space=sflag, size = 0x4, scoped, tag = 'scoped memory for tpu_custom_call.1']
    %8 = vsyncpa [#allocation4], 0
    %9 = vsyncpa [#allocation5], 0
    %10 = vsyncpa [#allocation8], 0
    // Predicated region
    $region2: #{tpu_custom_call.1} parent=1 // pred_check
      _
    $region3: #{tpu_custom_call.1} parent=1 // pred_check_branch
      %12 = sbr.rel (0) target = $region5
    $region4: #{tpu_custom_call.1} parent=1 // pred_region
      %s14 = ssub.s32 256, 256
      %15 = vsyncadd [#allocation4], %s14
      %s16 = sshll.u32 [#allocation3], 4
      %s17 = int_to_ptr.vmem [resolvable:$true] %s16
      %22 = dma.hbm_to_vmem [thread:$0]  %s0, 256, %s17, [#allocation4], 128, 128, 8
    $region5: #{tpu_custom_call.1} parent=1 // pred_fallthru
      _
    // Predicated region
    $region6: #{tpu_custom_call.1} parent=1 // pred_check
      _
    $region7: #{tpu_custom_call.1} parent=1 // pred_check_branch
      %24 = sbr.rel (0) target = $region9
    $region8: #{tpu_custom_call.1} parent=1 // pred_region
      %25 = dma.done [#allocation4], 256
    $region9: #{tpu_custom_call.1} parent=1 // pred_fallthru
      _
    %v26 = vld [vmem:[#allocation3] sm:$0xff]
    %v27 = vld [vmem:[#allocation3 + $0x8] sm:$0xff]
    %vm28 = vcmask 130048
    %29 = vst.msk [vmem:[#allocation2 + $0x2] sm:$0xff] %vm28, %v26
    %30 = vst.msk [vmem:[#allocation2 + $0xa] sm:$0xff] %vm28, %v27
    %v31 = vlaneseq
    %v32 = vshrl.u32 %v31, 7
    %v33 = vsub.s32 0, %v32
    %v34 = vrot.slane %v26, %v33
    %vm35 = vcmask 123904
    %36 = vst.msk [vmem:[#allocation2] sm:$0x3] %vm35, %v34
    %v37 = vlaneseq
    %v38 = vshrl.u32 %v37, 7
    %v39 = vsub.s32 7, %v38
    %v40 = vrot.slane %v27, %v39
    %41 = vst.msk [vmem:[#allocation2 + $0x12] sm:$0x3] %vm35, %v40
    %v42 = vld [vmem:[#allocation2] sm:$0xff]
    %v43 = vld [vmem:[#allocation2 + $0x8] sm:$0xff]
    %v44 = vadd.f32 %v42, 0.0
    %v45 = vadd.f32 %v43, 0.0
    %v46 = vld [vmem:[#allocation2 + $0x1] sm:$0xff]
    %v47 = vld [vmem:[#allocation2 + $0x9] sm:$0xff]
    %v48 = vadd.f32 %v44, %v46
    %v49 = vadd.f32 %v45, %v47
    %v50 = vld [vmem:[#allocation2 + $0x2] sm:$0xff]
    %v51 = vld [vmem:[#allocation2 + $0xa] sm:$0xff]
    %v52 = vadd.f32 %v48, %v50
    %v53 = vadd.f32 %v49, %v51
    %v54 = vld [vmem:[#allocation2 + $0x3] sm:$0xff]
    %v55 = vld [vmem:[#allocation2 + $0xb] sm:$0xff]
    %v56 = vadd.f32 %v52, %v54
    %v57 = vadd.f32 %v53, %v55
    %v58 = vld [vmem:[#allocation2 + $0x4] sm:$0xff]
    %v59 = vld [vmem:[#allocation2 + $0xc] sm:$0xff]
    %v60 = vadd.f32 %v56, %v58
    %v61 = vadd.f32 %v57, %v59
    %v62 = vmul.f32 %v60, 0.2
    %v63 = vmul.f32 %v61, 0.2
    %64 = vst.msk [vmem:[#allocation7] sm:$0xff] %vm28, %v62
    %65 = vst.msk [vmem:[#allocation7 + $0x8] sm:$0xff] %vm28, %v63
    %v66 = vsub.f32 %v26, %v62
    %v67 = vsub.f32 %v27, %v63
    %68 = vst.msk [vmem:[#allocation6] sm:$0xff] %vm28, %v66
    %69 = vst.msk [vmem:[#allocation6 + $0x8] sm:$0xff] %vm28, %v67
    // Predicated region
    $region10: #{tpu_custom_call.1} parent=1 // pred_check
      _
    $region11: #{tpu_custom_call.1} parent=1 // pred_check_branch
      %71 = sbr.rel (0) target = $region13
    $region12: #{tpu_custom_call.1} parent=1 // pred_region
      %s73 = ssub.s32 256, 256
      %74 = vsyncadd [#allocation5], %s73
      %s75 = sshll.u32 [#allocation6], 4
      %s76 = int_to_ptr.vmem [resolvable:$true] %s75
      %81 = dma.vmem_to_hbm [thread:$0]  %s76, 256, %s1, [#allocation5], 128, 128, 8
    $region13: #{tpu_custom_call.1} parent=1 // pred_fallthru
      _
    // Predicated region
    $region14: #{tpu_custom_call.1} parent=1 // pred_check
      _
    $region15: #{tpu_custom_call.1} parent=1 // pred_check_branch
      %83 = sbr.rel (0) target = $region17
    $region16: #{tpu_custom_call.1} parent=1 // pred_region
      %s85 = ssub.s32 256, 256
      %86 = vsyncadd [#allocation8], %s85
      %s87 = sshll.u32 [#allocation7], 4
      %s88 = int_to_ptr.vmem [resolvable:$true] %s87
      %93 = dma.vmem_to_hbm [thread:$0]  %s88, 256, %s2, [#allocation8], 128, 128, 8
    $region17: #{tpu_custom_call.1} parent=1 // pred_fallthru
      _
    // Predicated region
    $region18: #{tpu_custom_call.1} parent=1 // pred_check
      _
    $region19: #{tpu_custom_call.1} parent=1 // pred_check_branch
      %95 = sbr.rel (0) target = $region21
    $region20: #{tpu_custom_call.1} parent=1 // pred_region
      %96 = dma.done [#allocation5], 256
    $region21: #{tpu_custom_call.1} parent=1 // pred_fallthru
      _
    // Predicated region
    $region22: #{tpu_custom_call.1} parent=1 // pred_check
      _
    $region23: #{tpu_custom_call.1} parent=1 // pred_check_branch
      %98 = sbr.rel (0) target = $region25
    $region24: #{tpu_custom_call.1} parent=1 // pred_region
      %99 = dma.done [#allocation8], 256
    $region25: #{tpu_custom_call.1} parent=1 // pred_fallthru
      _
    %100 = vsyncpa [#allocation4], 1
    %101 = vsyncpa [#allocation5], 1
    %102 = vsyncpa [#allocation8], 1

</llo_original>
